<compile_context>
chip_gen: v7x
topology: tpu7x:2x2x1
jax: 0.10.0
libtpu: 0.0.40
codegen_flags: <defaults>
</compile_context>

<pallas_src>
import functools

import jax
import jax.numpy as jnp
from jax.experimental import pallas as pl
from jax.experimental.pallas import tpu as pltpu


def _round_up(x, m):
    return (x + m - 1) // m * m


def _vmem_limit_bytes():
    """Per-generation VMEM budget (~75% of capacity), with a safe fallback."""
    try:
        cap = pltpu.get_tpu_info().vmem_capacity_bytes
        return min(max(int(cap * 3 // 4), 32 * 1024 * 1024), 128 * 1024 * 1024)
    except Exception:
        return 64 * 1024 * 1024


def _pick_cin_block(c_in):
    """Largest convenient C_in tile that divides c_in (bounds VMEM for big input_dim)."""
    for ck in (512, 256, 128):
        if c_in % ck == 0:
            return ck
    return c_in


# ---------------------------------------------------------------------------
# Kernel 1: initial 1x1 conv (input projection), tiled over C_in so the main
# kernel never holds a full (C_in, T) block in VMEM.
# ---------------------------------------------------------------------------
def _proj_kernel(x_ref, w_ref, b_ref, o_ref, acc_ref, *, T):
    """x:(1,ck,Tp) bf16, w:(F,ck) bf16, b:(F,1) f32, o:(1,F,Tp) f32, acc:(F,Tp) f32."""
    k = pl.program_id(1)

    @pl.when(k == 0)
    def _():
        acc_ref[...] = jnp.zeros_like(acc_ref)

    acc_ref[...] += jnp.dot(w_ref[...], x_ref[0],
                            preferred_element_type=jnp.float32)

    @pl.when(k == pl.num_programs(1) - 1)
    def _():
        h = acc_ref[...] + b_ref[...]
        Tp = h.shape[-1]
        if Tp != T:
            # Zero the padded time tail (the bias made it nonzero) so the
            # downstream dilated taps see Conv1d zero-padding semantics.
            lane = jax.lax.broadcasted_iota(jnp.int32, h.shape, 1)
            h = jnp.where(lane < T, h, 0.0)
        o_ref[0] = h


# ---------------------------------------------------------------------------
# Kernel 2: dilated residual stack + output 1x1 conv, one batch element per
# grid step.  Channels on sublanes, time on lanes (C, T) layout.
# ---------------------------------------------------------------------------
def _tcn_kernel(h0_ref, wd_ref, bd_ref, w1_ref, b1_ref, w_out_ref, b_out_ref,
                o_ref, hbuf, *, num_layers, T, pad_left):
    """h0:(1,F,Tp) f32, wd:(L,3,F,F) bf16 (taps [t-d, t, t+d]), bd:(L,F,1) f32,
    w1:(L,F,F) bf16, b1:(L,F,1) f32, w_out:(C_out,F) bf16, b_out:(C_out,1) f32,
    o:(1,C_out,Tp) f32, hbuf: VMEM (F, pad_left + Tp + pad) bf16 halo buffer.
    """
    Tp = h0_ref.shape[-1]
    # Zero only the halo regions.  The centre [pad_left : pad_left+T) is fully
    # rewritten every layer; columns >= pad_left+T are never written so they
    # stay zero and give Conv1d zero-padding semantics on the right edge.
    hbuf[:, :pad_left] = jnp.zeros((hbuf.shape[0], pad_left), hbuf.dtype)
    hbuf[:, pad_left + T:] = jnp.zeros(
        (hbuf.shape[0], hbuf.shape[1] - pad_left - T), hbuf.dtype)

    h = h0_ref[0]                                          # (F, Tp) f32

    for l in range(num_layers):                            # static unroll (L small)
        d = 2 ** l                                         # dilation == padding
        h_bf = h.astype(hbuf.dtype)                        # centre tap, reused
        # Stash the valid T columns; +-d taps become static lane-offset reads.
        hbuf[:, pad_left:pad_left + T] = h_bf[:, :T]
        hm = hbuf[:, pad_left - d:pad_left - d + Tp]       # h[t - d] (zero-padded)
        hp = hbuf[:, pad_left + d:pad_left + d + Tp]       # h[t + d] (zero-padded)
        # Three accumulating MXU dots (no (3F,T) concat temporary).
        out = jnp.dot(wd_ref[l, 0], hm, preferred_element_type=jnp.float32)
        out = out + jnp.dot(wd_ref[l, 1], h_bf, preferred_element_type=jnp.float32)
        out = out + jnp.dot(wd_ref[l, 2], hp, preferred_element_type=jnp.float32)
        out = out + bd_ref[l]
        out = jnp.maximum(out, 0.0)                        # ReLU (f32, VPU)
        out = jnp.dot(w1_ref[l], out.astype(hbuf.dtype),
                      preferred_element_type=jnp.float32) + b1_ref[l]
        # Dropout(0.3): identity at inference (PyTorch eval mode).
        h = out + h                                        # residual, f32

    y = jnp.dot(w_out_ref[...], h.astype(hbuf.dtype),
                preferred_element_type=jnp.float32) + b_out_ref[...]
    o_ref[0] = y.astype(o_ref.dtype)


def single_stage_tcn(x_nct, params, num_layers):
    """x_nct: (B, C_in, T) float32 (PyTorch NCT). Returns (B, num_classes, T) f32."""
    w_in, b_in, wd, bd, w1, b1, w_out, b_out = params
    B, C_in, T = x_nct.shape
    F = w_in.shape[0]
    C_out = w_out.shape[0]

    bf16 = jnp.bfloat16
    Tp = _round_up(T, 128)                        # lane-dense time blocks
    pad = max(1, 2 ** (num_layers - 1)) if num_layers > 0 else 1
    pad_left = _round_up(pad, 128)                # lane-aligned hbuf centre

    x_p = x_nct
    if Tp != T:
        x_p = jnp.pad(x_nct, ((0, 0), (0, 0), (0, Tp - T)))
    x_bf = x_p.astype(bf16)

    w_in_bf = w_in.astype(bf16)
    # (L, F, 3, F) -> (L, 3, F, F): tap-major so wd[l, j] is a static (F,F) slice.
    wd_bf = jnp.transpose(wd, (0, 2, 1, 3)).astype(bf16)
    w1_bf = w1.astype(bf16)
    w_out_bf = w_out.astype(bf16)

    vmem_limit = _vmem_limit_bytes()

    # ---- stage 1: 1x1 input projection, C_in reduction grid axis ----
    ck = _pick_cin_block(C_in)
    nk = C_in // ck
    h0 = pl.pallas_call(
        functools.partial(_proj_kernel, T=T),
        out_shape=jax.ShapeDtypeStruct((B, F, Tp), jnp.float32),
        grid_spec=pltpu.PrefetchScalarGridSpec(
            num_scalar_prefetch=0,
            grid=(B, nk),
            in_specs=[
                pl.BlockSpec((1, ck, Tp), lambda b, k: (b, k, 0)),   # x
                pl.BlockSpec((F, ck), lambda b, k: (0, k)),          # w_in
                pl.BlockSpec((F, 1), lambda b, k: (0, 0)),           # b_in
            ],
            out_specs=pl.BlockSpec((1, F, Tp), lambda b, k: (b, 0, 0)),
            scratch_shapes=[pltpu.VMEM((F, Tp), jnp.float32)],
        ),
        compiler_params=pltpu.CompilerParams(
            dimension_semantics=("parallel", "arbitrary"),
            vmem_limit_bytes=vmem_limit,
        ),
    )(x_bf, w_in_bf, b_in)

    # ---- stage 2: dilated residual stack + output 1x1 conv ----
    def full(a):
        n = a.ndim
        return pl.BlockSpec(a.shape, lambda b, _n=n: (0,) * _n)

    out_p = pl.pallas_call(
        functools.partial(_tcn_kernel, num_layers=num_layers, T=T,
                          pad_left=pad_left),
        out_shape=jax.ShapeDtypeStruct((B, C_out, Tp), jnp.float32),
        grid_spec=pltpu.PrefetchScalarGridSpec(
            num_scalar_prefetch=0,
            grid=(B,),
            in_specs=[
                pl.BlockSpec((1, F, Tp), lambda b: (b, 0, 0)),       # h0
                full(wd_bf), full(bd),
                full(w1_bf), full(b1),
                full(w_out_bf), full(b_out),
            ],
            out_specs=pl.BlockSpec((1, C_out, Tp), lambda b: (b, 0, 0)),
            scratch_shapes=[pltpu.VMEM((F, pad_left + Tp + pad), bf16)],
        ),
        compiler_params=pltpu.CompilerParams(
            dimension_semantics=("parallel",),
            vmem_limit_bytes=vmem_limit,
        ),
    )(h0, wd_bf, bd, w1_bf, b1, w_out_bf, b_out)

    return out_p[:, :, :T]


def _reference(x_nct, params, num_layers):
    """Pure-JAX reference with identical math (same bf16 casts, f32 accumulation)."""
    w_in, b_in, wd, bd, w1, b1, w_out, b_out = params
    bf, f32 = jnp.bfloat16, jnp.float32
    x = x_nct.astype(bf)
    T = x.shape[-1]
    h = jnp.einsum("fc,bct->bft", w_in.astype(bf), x,
                   preferred_element_type=f32) + b_in[None]
    for l in range(num_layers):
        d = 2 ** l
        hb = h.astype(bf)
        z = jnp.zeros(hb.shape[:2] + (d,), bf)
        hm = jnp.concatenate([z, hb[:, :, :T - d]], axis=2)
        hp = jnp.concatenate([hb[:, :, d:], z], axis=2)
        out = (jnp.einsum("gc,bct->bgt", wd[l, :, 0].astype(bf), hm, preferred_element_type=f32)
               + jnp.einsum("gc,bct->bgt", wd[l, :, 1].astype(bf), hb, preferred_element_type=f32)
               + jnp.einsum("gc,bct->bgt", wd[l, :, 2].astype(bf), hp, preferred_element_type=f32)
               + bd[l][None])
        out = jnp.maximum(out, 0.0)
        out = jnp.einsum("gf,bft->bgt", w1[l].astype(bf), out.astype(bf),
                         preferred_element_type=f32) + b1[l][None]
        h = out + h
    y = jnp.einsum("cf,bft->bct", w_out.astype(bf), h.astype(bf),
                   preferred_element_type=f32) + b_out[None]
    return y


def make_params(key, num_layers, num_f_maps, input_dim, num_classes):
    """Deterministic synthetic parameters in (out, in[, tap]) matmul layout."""
    ks = jax.random.split(key, 8)
    s = 0.1
    f32 = jnp.float32
    w_in = s * jax.random.normal(ks[0], (num_f_maps, input_dim), f32)
    b_in = s * jax.random.normal(ks[1], (num_f_maps, 1), f32)
    wd = s * jax.random.normal(ks[2], (num_layers, num_f_maps, 3, num_f_maps), f32)
    bd = s * jax.random.normal(ks[3], (num_layers, num_f_maps, 1), f32)
    w1 = s * jax.random.normal(ks[4], (num_layers, num_f_maps, num_f_maps), f32)
    b1 = s * jax.random.normal(ks[5], (num_layers, num_f_maps, 1), f32)
    w_out = s * jax.random.normal(ks[6], (num_classes, num_f_maps), f32)
    b_out = s * jax.random.normal(ks[7], (num_classes, 1), f32)
    return (w_in, b_in, wd, bd, w1, b1, w_out, b_out)


if __name__ == "__main__":
    # small, module-consistent shapes
    num_layers = 3
    num_f_maps = 16
    input_dim = 8
    num_classes = 5
    B, T = 2, 32

    key = jax.random.PRNGKey(0)
    kx, kp = jax.random.split(key)
    x = jax.random.normal(kx, (B, input_dim, T), jnp.float32)   # PyTorch NCT layout
    params = make_params(kp, num_layers, num_f_maps, input_dim, num_classes)

    out = single_stage_tcn(x, params, num_layers)
    out = jax.block_until_ready(out)

    ref = _reference(x, params, num_layers)
    assert out.shape == (B, num_classes, T), out.shape
    assert jnp.allclose(out, ref, atol=1e-2, rtol=1e-2), \
        float(jnp.max(jnp.abs(out - ref)))

    print("KERNEL_OK")
</pallas_src>

<mosaic_0001>
module attributes {stable_mosaic.version = 11 : i64} {
  func.func @_proj_kernel(%arg0: i32, %arg1: i32, %arg2: memref<1x8x128xbf16, #tpu.memory_space<vmem>>, %arg3: memref<16x8xbf16, #tpu.memory_space<vmem>>, %arg4: memref<16x1xf32, #tpu.memory_space<vmem>>, %arg5: memref<1x16x128xf32, #tpu.memory_space<vmem>>, %arg6: memref<16x128xf32, #tpu.memory_space<vmem>>) attributes {dimension_semantics = [#tpu.dimension_semantics<parallel>, #tpu.dimension_semantics<arbitrary>], iteration_bounds = array<i64: 2, 1>, scalar_prefetch = 0 : i64, scratch_operands = 1 : i64, tpu.core_type = #tpu.core_type<tc>, window_params = [{transform_indices = @transform_0, window_bounds = array<i64: 1, 8, 128>}, {transform_indices = @transform_1, window_bounds = array<i64: 16, 8>}, {pipeline_mode = #tpu.pipeline_mode<synchronous>, transform_indices = @transform_2, window_bounds = array<i64: 16, 1>}, {transform_indices = @transform_3, window_bounds = array<i64: 1, 16, 128>}]} {
    %c0_i32 = arith.constant 0 : i32
    %0 = arith.cmpi eq, %arg1, %c0_i32 : i32
    %1 = arith.extui %0 : i1 to i32
    %c0_i32_0 = arith.constant 0 : i32
    %2 = arith.cmpi ne, %1, %c0_i32_0 : i32
    scf.if %2 {
      %cst_11 = arith.constant 0.000000e+00 : f32
      %13 = vector.broadcast %cst_11 : f32 to vector<16x128xf32>
      %c0_12 = arith.constant 0 : index
      %c0_13 = arith.constant 0 : index
      %14 = vector.load %arg6[%c0_12, %c0_13] : memref<16x128xf32, #tpu.memory_space<vmem>>, vector<16x128xf32>
      tpu.vector_store %arg6[%c0_12, %c0_13], %13 {strides = array<i32>} : memref<16x128xf32, #tpu.memory_space<vmem>>, vector<16x128xf32>,
    } else {
    }
    %c0 = arith.constant 0 : index
    %c0_1 = arith.constant 0 : index
    %3 = vector.load %arg6[%c0, %c0_1] : memref<16x128xf32, #tpu.memory_space<vmem>>, vector<16x128xf32>
    %c0_2 = arith.constant 0 : index
    %c0_3 = arith.constant 0 : index
    %4 = vector.load %arg3[%c0_2, %c0_3] : memref<16x8xbf16, #tpu.memory_space<vmem>>, vector<16x8xbf16>
    %c0_4 = arith.constant 0 : index
    %c0_5 = arith.constant 0 : index
    %c0_6 = arith.constant 0 : index
    %5 = vector.load %arg2[%c0_4, %c0_5, %c0_6] : memref<1x8x128xbf16, #tpu.memory_space<vmem>>, vector<1x8x128xbf16>
    %6 = vector.shape_cast %5 : vector<1x8x128xbf16> to vector<8x128xbf16>
    %cst = arith.constant dense<0.000000e+00> : vector<16x128xf32>
    %7 = tpu.matmul %4, %6, %cst {dimension_numbers = #tpu.dot_dimension_numbers<[1], [0], [0], [1], [0, 0, 1, 1], [], []>} : vector<16x8xbf16>, vector<8x128xbf16>, vector<16x128xf32> -> vector<16x128xf32>
    %8 = arith.addf %3, %7 : vector<16x128xf32>
    %c0_7 = arith.constant 0 : index
    %c0_8 = arith.constant 0 : index
    %9 = vector.load %arg6[%c0_7, %c0_8] : memref<16x128xf32, #tpu.memory_space<vmem>>, vector<16x128xf32>
    tpu.vector_store %arg6[%c0_7, %c0_8], %8 {strides = array<i32>} : memref<16x128xf32, #tpu.memory_space<vmem>>, vector<16x128xf32>,
    %c0_i32_9 = arith.constant 0 : i32
    %10 = arith.cmpi eq, %arg1, %c0_i32_9 : i32
    %11 = arith.extui %10 : i1 to i32
    %c0_i32_10 = arith.constant 0 : i32
    %12 = arith.cmpi ne, %11, %c0_i32_10 : i32
    scf.if %12 {
      %c0_11 = arith.constant 0 : index
      %c0_12 = arith.constant 0 : index
      %13 = vector.load %arg6[%c0_11, %c0_12] : memref<16x128xf32, #tpu.memory_space<vmem>>, vector<16x128xf32>
      %c0_13 = arith.constant 0 : index
      %c0_14 = arith.constant 0 : index
      %14 = vector.load %arg4[%c0_13, %c0_14] : memref<16x1xf32, #tpu.memory_space<vmem>>, vector<16x1xf32>
      %15 = vector.broadcast %14 : vector<16x1xf32> to vector<16x128xf32>
      %16 = arith.addf %13, %15 : vector<16x128xf32>
      %17 = tpu.iota {dimensions = array<i32: 1>} : vector<16x128xi32>
      %c32_i32 = arith.constant 32 : i32
      %18 = vector.broadcast %c32_i32 : i32 to vector<16x128xi32>
      %19 = arith.cmpi slt, %17, %18 : vector<16x128xi32>
      %cst_15 = arith.constant 0.000000e+00 : f32
      %20 = vector.broadcast %cst_15 : f32 to vector<16x128xf32>
      %21 = arith.select %19, %16, %20 : vector<16x128xi1>, vector<16x128xf32>
      %c0_16 = arith.constant 0 : index
      %c0_17 = arith.constant 0 : index
      %c0_18 = arith.constant 0 : index
      %22 = vector.load %arg5[%c0_16, %c0_17, %c0_18] : memref<1x16x128xf32, #tpu.memory_space<vmem>>, vector<1x16x128xf32>
      %23 = vector.shape_cast %22 : vector<1x16x128xf32> to vector<16x128xf32>
      %24 = vector.shape_cast %21 : vector<16x128xf32> to vector<1x16x128xf32>
      tpu.vector_store %arg5[%c0_16, %c0_17, %c0_18], %24 {strides = array<i32>} : memref<1x16x128xf32, #tpu.memory_space<vmem>>, vector<1x16x128xf32>,
    } else {
    }
    return
  }
  func.func @transform_0(%arg0: i32, %arg1: i32) -> (i32, i32, i32) {
    %c0_i32 = arith.constant 0 : i32
    %c0_i32_0 = arith.constant 0 : i32
    return %arg0, %arg1, %c0_i32 : i32, i32, i32
  }
  func.func @transform_1(%arg0: i32, %arg1: i32) -> (i32, i32) {
    %c0_i32 = arith.constant 0 : i32
    %c0_i32_0 = arith.constant 0 : i32
    return %c0_i32, %arg1 : i32, i32
  }
  func.func @transform_2(%arg0: i32, %arg1: i32) -> (i32, i32) {
    %c0_i32 = arith.constant 0 : i32
    %c0_i32_0 = arith.constant 0 : i32
    %c0_i32_1 = arith.constant 0 : i32
    return %c0_i32, %c0_i32_0 : i32, i32
  }
  func.func @transform_3(%arg0: i32, %arg1: i32) -> (i32, i32, i32) {
    %c0_i32 = arith.constant 0 : i32
    %c0_i32_0 = arith.constant 0 : i32
    %c0_i32_1 = arith.constant 0 : i32
    return %arg0, %c0_i32, %c0_i32_0 : i32, i32, i32
  }
}

</mosaic_0001>

<llo_original>
// kernel: tpu_custom_call.1
$region0: #{tpu_custom_call.1}
  #allocation0 [shape = 'u32[]', space=smem, size = 0x4, offset = 0x4, fixed_abs, tag = 'smem constant byte address 0x4 - core index']
  #allocation1 [shape = 'u32[144,128]{1,0:T(1,128)}', space=vmem, size = 0x12000, scoped, tag = 'internal scratch']
  #allocation2 [shape = 'f32[16,128]{1,0:T(8,128)}', space=vmem, size = 0x2000, scoped, tag = 'scratch operand']
  %s0 = inlined_call_operand.hbm [shape: bf16[2,8,128], index: 0, kind: input, shape index: {}]
  %s1 = inlined_call_operand.hbm [shape: bf16[16,8], index: 1, kind: input, shape index: {}]
  %s2 = inlined_call_operand.hbm [shape: f32[16,1], index: 2, kind: input, shape index: {}]
  %s3 = inlined_call_operand.hbm [shape: f32[2,16,128], index: 3, kind: output, shape index: {}]
  %s4 = sld [smem:[#allocation0]]
  $region65: #{tpu_custom_call.1} parent=0
    _
  %s6 = ssub.s32 1, %s4
  %s7 = scalar_select 0, %s6, %s4
  $region1: #{tpu_custom_call.1} parent=0
    #allocation3 [shape = 'u8[4096]{0}', space=vmem, size = 0x1000, scoped, tag = 'input window, operand 0']
    #allocation4 [shape = 's32[2]{0}', space=sflag, size = 0x8, scoped, tag = 'scoped memory for tpu_custom_call.1']
    #allocation5 [shape = 's32[2]{0}', space=sflag, size = 0x8, scoped, tag = 'scoped memory for tpu_custom_call.1']
    #allocation6 [shape = 'u8[4096]{0}', space=vmem, size = 0x1000, scoped, tag = 'input window, operand 1, single buffered']
    #allocation7 [shape = 's32[1]{0}', space=sflag, size = 0x4, scoped, tag = 'scoped memory for tpu_custom_call.1']
    #allocation8 [shape = 'u8[8192]{0}', space=vmem, size = 0x2000, scoped, tag = 'input window, operand 2, single buffered']
    #allocation9 [shape = 'u8[16384]{0}', space=vmem, size = 0x4000, scoped, tag = 'output window, operand 0']
    %8 = vsyncpa [#allocation4], 0
    %s9 = scalar_lea.sflag [#allocation4], 1
    %10 = vsyncpa %s9, 0
    %11 = vsyncpa [#allocation7], 0
    %12 = vsyncpa [#allocation5], 0
    %s13 = scalar_lea.sflag [#allocation5], 1
    %14 = vsyncpa %s13, 0
    loop: start=0, step=1, limit=4
    $region2: #{tpu_custom_call.1} parent=1 // loop_pre_header
      _
    $region3: #{tpu_custom_call.1} parent=1 // loop_header
      %s16 = sphi 0, %s20
      %p17 = scmp.ge.s32.totalorder %s16, 4
      %s23 = sphi 0, %s35
      %s24 = sphi 0, %s31
      %s25 = sphi 0, %s23
      %s26 = sphi 0, %s24
      %s27 = sphi 0, %s25
      %s28 = sphi 0, %s26
      %s40 = sphi 0, %s42
      %s43 = sphi 0, %s40
      %s44 = sphi 0, %s43
      %s60 = sphi 0, %s44
      %s66 = sphi 0, %s68
      %s69 = sphi 0, %s66
      %s70 = sphi 0, %s69
      %s86 = sphi 0, %s70
      %s90 = sphi 0, %s90
      %s92 = sphi 0, %s90
      %s93 = sphi 0, %s92
      %s107 = sphi 0, %s93
      %s113 = sphi 0, %s115
      %s116 = sphi 0, %s113
      %s117 = sphi 0, %s116
      %s133 = sphi 0, %s117
    $region4: #{tpu_custom_call.1} parent=1 // loop_header_branch
      %19 = sbr.rel (%p17) target = $region8
    $region5: #{tpu_custom_call.1} parent=1 // loop_body
      %s21 = ssub.s32 %s16, 1
      %s22 = ssub.s32 %s16, 2
      %s29 = sadd.s32 1, %s24
      %p30 = scmp.ge.s32.totalorder %s29, 1
      %s31 = scalar_select %p30, 0, %s29
      %s32 = sadd.s32 1, %s23
      %s33 = scalar_select %p30, %s32, %s23
      %p34 = scmp.ge.s32.totalorder %s33, 2
      %s35 = scalar_select %p34, 0, %s33
      %s36 = ssub.s32 %s23, %s35
      %s37 = ssub.s32 %s24, %s31
      %s38 = sor.u32 %s36, %s37
      %p39 = scmp.eq.s32.totalorder %s38, 0
      %s41 = sadd.s32 %s40, 1
      %s42 = scalar_select %p39, %s40, %s41
      %p45 = pneg %p39
      %p46 = scmp.eq.s32.totalorder %s16, 1
      %p47 = por %p45, %p46
      %p48 = scmp.ne.s32.totalorder %s40, %s43
      %p49 = scmp.eq.s32.totalorder %s16, 0
      %p50 = por %p48, %p49
      %p51 = scmp.ne.s32.totalorder %s40, %s43
      %p52 = scmp.eq.s32.totalorder %s21, 1
      %p53 = por %p51, %p52
      %p54 = scmp.ne.s32.totalorder %s43, %s44
      %p55 = scmp.eq.s32.totalorder %s21, 0
      %p56 = por %p54, %p55
      %p57 = scmp.ne.s32.totalorder %s43, %s44
      %p58 = scmp.eq.s32.totalorder %s22, 1
      %p59 = por %p57, %p58
      %p61 = scmp.ne.s32.totalorder %s44, %s60
      %p62 = scmp.eq.s32.totalorder %s22, 0
      %p63 = por %p61, %p62
      %s64 = ssub.s32 %s24, %s31
      %p65 = scmp.eq.s32.totalorder %s64, 0
      %s67 = sadd.s32 %s66, 1
      %s68 = scalar_select %p65, %s66, %s67
      %p71 = pneg %p65
      %p72 = scmp.eq.s32.totalorder %s16, 1
      %p73 = por %p71, %p72
      %p74 = scmp.ne.s32.totalorder %s66, %s69
      %p75 = scmp.eq.s32.totalorder %s16, 0
      %p76 = por %p74, %p75
      %p77 = scmp.ne.s32.totalorder %s66, %s69
      %p78 = scmp.eq.s32.totalorder %s21, 1
      %p79 = por %p77, %p78
      %p80 = scmp.ne.s32.totalorder %s69, %s70
      %p81 = scmp.eq.s32.totalorder %s21, 0
      %p82 = por %p80, %p81
      %p83 = scmp.ne.s32.totalorder %s69, %s70
      %p84 = scmp.eq.s32.totalorder %s22, 1
      %p85 = por %p83, %p84
      %p87 = scmp.ne.s32.totalorder %s70, %s86
      %p88 = scmp.eq.s32.totalorder %s22, 0
      %p89 = por %p87, %p88
      %s91 = sadd.s32 %s90, 1
      %p94 = scmp.eq.s32.totalorder %s16, 1
      %p95 = scmp.ne.s32.totalorder %s90, %s92
      %p96 = scmp.eq.s32.totalorder %s16, 0
      %p97 = por %p95, %p96
      %p98 = scmp.ne.s32.totalorder %s90, %s92
      %p99 = scmp.eq.s32.totalorder %s21, 1
      %p100 = por %p98, %p99
      %p101 = scmp.ne.s32.totalorder %s92, %s93
      %p102 = scmp.eq.s32.totalorder %s21, 0
      %p103 = por %p101, %p102
      %p104 = scmp.ne.s32.totalorder %s92, %s93
      %p105 = scmp.eq.s32.totalorder %s22, 1
      %p106 = por %p104, %p105
      %p108 = scmp.ne.s32.totalorder %s93, %s107
      %p109 = scmp.eq.s32.totalorder %s22, 0
      %p110 = por %p108, %p109
      %s111 = ssub.s32 %s23, %s35
      %p112 = scmp.eq.s32.totalorder %s111, 0
      %s114 = sadd.s32 %s113, 1
      %s115 = scalar_select %p112, %s113, %s114
      %p118 = pneg %p112
      %p119 = scmp.eq.s32.totalorder %s16, 1
      %p120 = por %p118, %p119
      %p121 = scmp.ne.s32.totalorder %s113, %s116
      %p122 = scmp.eq.s32.totalorder %s16, 0
      %p123 = por %p121, %p122
      %p124 = scmp.ne.s32.totalorder %s113, %s116
      %p125 = scmp.eq.s32.totalorder %s21, 1
      %p126 = por %p124, %p125
      %p127 = scmp.ne.s32.totalorder %s116, %s117
      %p128 = scmp.eq.s32.totalorder %s21, 0
      %p129 = por %p127, %p128
      %p130 = scmp.ne.s32.totalorder %s116, %s117
      %p131 = scmp.eq.s32.totalorder %s22, 1
      %p132 = por %p130, %p131
      %p134 = scmp.ne.s32.totalorder %s117, %s133
      %p135 = scmp.eq.s32.totalorder %s22, 0
      %p136 = por %p134, %p135
      %p137 = scmp.le.s32.totalorder 1, %s16
      %p138 = scmp.lt.s32.totalorder %s16, 3
      %p139 = pnand %p137, %p138
      %p140 = pneg %p139
      // Predicated region
      $region9: #{tpu_custom_call.1} parent=5 // pred_check
        _
      $region10: #{tpu_custom_call.1} parent=5 // pred_check_branch
        %142 = sbr.rel (%p139) target = $region12
      $region11: #{tpu_custom_call.1} parent=5 // pred_region
        %s143 = ssub.s32 %s16, 1
        // Predicated region
        $region13: #{tpu_custom_call.1} parent=11 // pred_check
          %p144 = pneg %p82
        $region14: #{tpu_custom_call.1} parent=11 // pred_check_branch
          %146 = sbr.rel (%p144) target = $region16
        $region15: #{tpu_custom_call.1} parent=11 // pred_region
          %s148 = ssub.s32 128, 128
          %149 = vsyncadd [#allocation7], %s148
          %s150 = smul.addr %s26, 64
          %s151 = scalar_lea.hbm %s1, %s150
          %s152 = sshll.u32 [#allocation6], 4
          %s153 = int_to_ptr.vmem [resolvable:$true] %s152
          %158 = dma.hbm_to_vmem [thread:$0]  %s151, 128, %s153, [#allocation7], 64, 64, 4
        $region16: #{tpu_custom_call.1} parent=11 // pred_fallthru
          _
        // Predicated region
        $region17: #{tpu_custom_call.1} parent=11 // pred_check
          %p159 = pneg %p103
        $region18: #{tpu_custom_call.1} parent=11 // pred_check_branch
          %161 = sbr.rel (%p159) target = $region20
        $region19: #{tpu_custom_call.1} parent=11 // pred_region
          %s163 = ssub.s32 256, 256
          %164 = vsyncadd [#allocation7], %s163
          %s165 = sshll.u32 [#allocation8], 4
          %s166 = int_to_ptr.vmem [resolvable:$true] %s165
          %171 = dma.hbm_to_vmem [thread:$0]  %s2, 256, %s166, [#allocation7], 128, 128, 8
        $region20: #{tpu_custom_call.1} parent=11 // pred_fallthru
          _
      $region12: #{tpu_custom_call.1} parent=5 // pred_fallthru
        _
      %p172 = scmp.lt.s32.totalorder %s16, 2
      // Predicated region
      $region21: #{tpu_custom_call.1} parent=5 // pred_check
        %p173 = pneg %p172
      $region22: #{tpu_custom_call.1} parent=5 // pred_check_branch
        %175 = sbr.rel (%p173) target = $region24
      $region23: #{tpu_custom_call.1} parent=5 // pred_region
        // Predicated region
        $region25: #{tpu_custom_call.1} parent=23 // pred_check
          %p176 = pneg %p50
        $region26: #{tpu_custom_call.1} parent=23 // pred_check_branch
          %178 = sbr.rel (%p176) target = $region28
        $region27: #{tpu_custom_call.1} parent=23 // pred_region
          %s179 = sand.u32 %s40, 1
          %s180 = scalar_lea.sflag [#allocation4], %s179
          %s181 = sand.u32 %s40, 1
          %s182 = smul.addr %s181, 4
          %s183 = scalar_lea.vmem [#allocation3], %s182
          %s185 = ssub.s32 64, 64
          %186 = vsyncadd %s180, %s185
          %s187 = sadd.s32 %s24, %s23
          %s188 = smul.addr %s187, 64
          %s189 = scalar_lea.hbm %s0, %s188
          %s191 = sshll.u32 %s183, 4
          %s192 = int_to_ptr.vmem [resolvable:$true] %s191
          %194 = dma.hbm_to_vmem [thread:$0]  %s189, 64, %s192, %s180
        $region28: #{tpu_custom_call.1} parent=23 // pred_fallthru
          _
      $region24: #{tpu_custom_call.1} parent=5 // pred_fallthru
        _
      %p195 = scmp.le.s32.totalorder 1, %s16
      %p196 = scmp.lt.s32.totalorder %s16, 3
      %p197 = pnand %p195, %p196
      %p198 = pneg %p197
      // Predicated region
      $region29: #{tpu_custom_call.1} parent=5 // pred_check
        _
      $region30: #{tpu_custom_call.1} parent=5 // pred_check_branch
        %200 = sbr.rel (%p197) target = $region32
      $region31: #{tpu_custom_call.1} parent=5 // pred_region
        %s201 = ssub.s32 %s16, 1
        %s202 = sand.u32 %s43, 1
        %s203 = scalar_lea.sflag [#allocation4], %s202
        %s204 = sand.u32 %s43, 1
        %s205 = smul.addr %s204, 4
        %s206 = scalar_lea.vmem [#allocation3], %s205
        // Predicated region
        $region33: #{tpu_custom_call.1} parent=31 // pred_check
          %p207 = pneg %p56
        $region34: #{tpu_custom_call.1} parent=31 // pred_check_branch
          %209 = sbr.rel (%p207) target = $region36
        $region35: #{tpu_custom_call.1} parent=31 // pred_region
          %210 = dma.done %s203, 64
        $region36: #{tpu_custom_call.1} parent=31 // pred_fallthru
          _
        // Predicated region
        $region37: #{tpu_custom_call.1} parent=31 // pred_check
          %p211 = pneg %p82
        $region38: #{tpu_custom_call.1} parent=31 // pred_check_branch
          %213 = sbr.rel (%p211) target = $region40
        $region39: #{tpu_custom_call.1} parent=31 // pred_region
          %214 = dma.done [#allocation7], 128
        $region40: #{tpu_custom_call.1} parent=31 // pred_fallthru
          _
        // Predicated region
        $region41: #{tpu_custom_call.1} parent=31 // pred_check
          %p215 = pneg %p103
        $region42: #{tpu_custom_call.1} parent=31 // pred_check_branch
          %217 = sbr.rel (%p215) target = $region44
        $region43: #{tpu_custom_call.1} parent=31 // pred_region
          %218 = dma.done [#allocation7], 256
        $region44: #{tpu_custom_call.1} parent=31 // pred_fallthru
          _
        %s219 = sand.u32 %s43, 1
        %s220 = scalar_lea.sflag [#allocation4], %s219
        %s221 = sand.u32 %s43, 1
        %s222 = smul.addr %s221, 4
        %s223 = scalar_lea.vmem [#allocation3], %s222
        %p224 = pneg %p56
        %p225 = pneg %p53
        %p226 = pneg %p82
        %p227 = pneg %p79
        %p228 = pneg %p103
        %p229 = pneg %p100
        %p230 = pneg %p129
        %p231 = pneg %p126
        %s232 = sand.u32 %s116, 1
        %s233 = scalar_lea.sflag [#allocation5], %s232
        %s234 = sand.u32 %s116, 1
        %s235 = smul.addr %s234, 16
        %s236 = scalar_lea.vmem [#allocation9], %s235
        %p238 = scmp.eq.s32.totalorder %s26, 0
        // Predicated region
        $region45: #{tpu_custom_call.1} parent=31 // pred_check
          %p239 = pneg %p238
        $region46: #{tpu_custom_call.1} parent=31 // pred_check_branch
          %241 = sbr.rel (%p239) target = $region48
        $region47: #{tpu_custom_call.1} parent=31 // pred_region
          %242 = vst [vmem:[#allocation2] sm:$0xff] 0.0
          %243 = vst [vmem:[#allocation2 + $0x8] sm:$0xff] 0.0
        $region48: #{tpu_custom_call.1} parent=31 // pred_fallthru
          _
        %v244 = vld [vmem:[#allocation2] sm:$0xff]
        %v245 = vld [vmem:[#allocation2 + $0x8] sm:$0xff]
        %v246 = vld [vmem:[#allocation6] sm:$0xf]
        %v247 = vld [vmem:[#allocation6 + $0x4] sm:$0xf]
        %v248 = vld [vmem:[%s206] sm:$0xf]
        %v251 = vunpack.c.l.b16 %v246
        %v252 = vunpack.c.l.b16 %v247
        %v253 = vpack.c.b16 %v252, %v251
        %vm254 = vcmask 64512
        %v256 = vsel %vm254, %v253, 0
        %vm258 = vcmask 1043456
        %v260 = vsel %vm258, %v248, 0
        %262 = vmatprep.subr.bf16.mxu0 0
        %263 = vmatpush1.bf16.msra.mxu0 %v260
        %264 = vmatprep.subr.bf16.mxu0 0
        %265 = vmatpush1.bf16.msra.mxu0 0
        %266 = vmatprep.subr.bf16.mxu0 0
        %267 = vmatpush1.bf16.msra.mxu0 0
        %268 = vmatprep.subr.bf16.mxu0 0
        %269 = vmatpush1.bf16.msra.mxu0 0
        %270 = vmatprep.subr.bf16.mxu0 0
        %271 = vmatpush1.bf16.msra.mxu0 0
        %272 = vmatprep.subr.bf16.mxu0 0
        %273 = vmatpush1.bf16.msra.mxu0 0
        %274 = vmatprep.subr.bf16.mxu0 0
        %275 = vmatpush1.bf16.msra.mxu0 0
        %276 = vmatprep.subr.bf16.mxu0 0
        %277 = vmatpush1.bf16.msra.mxu0 0
        %278 = vmatprep.subr.bf16.mxu0 0
        %279 = vmatpush1.bf16.msra.mxu0 0
        %280 = vmatprep.subr.bf16.mxu0 0
        %281 = vmatpush1.bf16.msra.mxu0 0
        %282 = vmatprep.subr.bf16.mxu0 0
        %283 = vmatpush1.bf16.msra.mxu0 0
        %284 = vmatprep.subr.bf16.mxu0 0
        %285 = vmatpush1.bf16.msra.mxu0 0
        %286 = vmatprep.subr.bf16.mxu0 0
        %287 = vmatpush1.bf16.msra.mxu0 0
        %288 = vmatprep.subr.bf16.mxu0 0
        %289 = vmatpush1.bf16.msra.mxu0 0
        %290 = vmatprep.subr.bf16.mxu0 0
        %291 = vmatpush1.bf16.msra.mxu0 0
        %292 = vmatprep.subr.bf16.mxu0 0
        %293 = vmatpush1.bf16.msra.mxu0 0
        %294 = vmatprep.mubr.bf16.mxu0 0
        %295 = vmatmul.mubr.bf16.gmra.mrb[0].mxu0 %v256
        %v296 = vpop.f32.mrb[0].mxu0
        %v297 = vadd.f32 0.0, %v296
        %v298 = vpop.f32.mrb[0].mxu0
        %v299 = vpop.f32.mrb[0].mxu0
        %v300 = vadd.f32 0.0, %v299
        %v301 = vpop.f32.mrb[0].mxu0
        %302 = vdwg.mxu0
        %v303 = vadd.f32 %v244, %v297
        %v304 = vadd.f32 %v245, %v300
        %305 = vst [vmem:[#allocation2] sm:$0xff] %v303
        %306 = vst [vmem:[#allocation2 + $0x8] sm:$0xff] %v304
        // Predicated region
        $region49: #{tpu_custom_call.1} parent=31 // pred_check
          %p307 = pneg %p238
        $region50: #{tpu_custom_call.1} parent=31 // pred_check_branch
          %309 = sbr.rel (%p307) target = $region52
        $region51: #{tpu_custom_call.1} parent=31 // pred_region
          %v310 = vld [vmem:[#allocation2] sm:$0xff]
          %v311 = vld [vmem:[#allocation2 + $0x8] sm:$0xff]
          %v312 = vld [vmem:[#allocation8] sm:$0xff]
          %v313 = vld [vmem:[#allocation8 + $0x8] sm:$0xff]
          %315 = vset.pattern.permute.xlu0 0
          %316 = vperm.xlu0 %315, %v312
          %v317 = vpop.permute.xlu0 %316
          %320 = vset.pattern.permute.xlu0 0
          %321 = vperm.xlu0 %320, %v313
          %v322 = vpop.permute.xlu0 %321
          %v324 = vadd.f32 %v310, %v317
          %v325 = vadd.f32 %v311, %v322
          %v326 = vlaneseq
          %v327 = vand.u32 %v326, 127
          %vm328 = vcmp.lt.s32.totalorder %v327, 32
          %v329 = vsel %vm328, %v324, 0.0
          %v330 = vsel %vm328, %v325, 0.0
          %331 = vst [vmem:[%s236] sm:$0xff] %v329
          %332 = vst [vmem:[%s236 + $0x8] sm:$0xff] %v330
        $region52: #{tpu_custom_call.1} parent=31 // pred_fallthru
          _
        %s333 = sand.u32 %s116, 1
        %s334 = scalar_lea.sflag [#allocation5], %s333
        %s335 = sand.u32 %s116, 1
        %s336 = smul.addr %s335, 16
        %s337 = scalar_lea.vmem [#allocation9], %s336
        // Predicated region
        $region53: #{tpu_custom_call.1} parent=31 // pred_check
          %p338 = pneg %p126
        $region54: #{tpu_custom_call.1} parent=31 // pred_check_branch
          %340 = sbr.rel (%p338) target = $region56
        $region55: #{tpu_custom_call.1} parent=31 // pred_region
          %s342 = ssub.s32 256, 256
          %343 = vsyncadd %s334, %s342
          %s344 = smul.addr %s25, 2
          %s345 = smul.addr %s344, 128
          %s346 = scalar_lea.hbm %s3, %s345
          %s347 = sshll.u32 %s337, 4
          %s348 = int_to_ptr.vmem [resolvable:$true] %s347
          %353 = dma.vmem_to_hbm [thread:$0]  %s348, 256, %s346, %s334, 128, 128, 8
        $region56: #{tpu_custom_call.1} parent=31 // pred_fallthru
          _
      $region32: #{tpu_custom_call.1} parent=5 // pred_fallthru
        _
      %p354 = scmp.le.s32.totalorder 2, %s16
      // Predicated region
      $region57: #{tpu_custom_call.1} parent=5 // pred_check
        %p355 = pneg %p354
      $region58: #{tpu_custom_call.1} parent=5 // pred_check_branch
        %357 = sbr.rel (%p355) target = $region60
      $region59: #{tpu_custom_call.1} parent=5 // pred_region
        %s358 = ssub.s32 %s16, 2
        // Predicated region
        $region61: #{tpu_custom_call.1} parent=59 // pred_check
          %p359 = pneg %p132
        $region62: #{tpu_custom_call.1} parent=59 // pred_check_branch
          %361 = sbr.rel (%p359) target = $region64
        $region63: #{tpu_custom_call.1} parent=59 // pred_region
          %s362 = sand.u32 %s117, 1
          %s363 = scalar_lea.sflag [#allocation5], %s362
          %s364 = sand.u32 %s117, 1
          %s365 = smul.addr %s364, 16
          %s366 = scalar_lea.vmem [#allocation9], %s365
          %367 = dma.done %s363, 256
        $region64: #{tpu_custom_call.1} parent=59 // pred_fallthru
          _
      $region60: #{tpu_custom_call.1} parent=5 // pred_fallthru
        _
    $region6: #{tpu_custom_call.1} parent=1 // loop_footer
      %s20 = sadd.s32 1, %s16
    $region7: #{tpu_custom_call.1} parent=1 // loop_footer_branch
      %15 = sbr.rel target = $region3
    $region8: #{tpu_custom_call.1} parent=1 // loop_exit
      _
    %368 = vsyncpa [#allocation4], 1
    %s369 = scalar_lea.sflag [#allocation4], 1
    %370 = vsyncpa %s369, 1
    %371 = vsyncpa [#allocation7], 1
    %372 = vsyncpa [#allocation5], 1
    %s373 = scalar_lea.sflag [#allocation5], 1
    %374 = vsyncpa %s373, 1

</llo_original>
